<compile_context>
chip_gen: v7x
topology: tpu7x:2x2x1
jax: 0.10.0
libtpu: 0.0.40
codegen_flags: <defaults>
</compile_context>

<pallas_src>
import functools

import jax
import jax.numpy as jnp
from jax import lax
from jax.experimental import pallas as pl
from jax.experimental.pallas import tpu as pltpu


def _ntxent_lse_kernel(zq_ref, zk_ref, lse_ref, *, inv_temp):
    """One (row-tile, key-tile) step of the streaming log-sum-exp.

    zq_ref  : (Tq, D) pre-normalized query rows (scaled by sqrt(1/T))
    zk_ref  : (Tk, D) pre-normalized key rows   (scaled by sqrt(1/T))
    lse_ref : (Tq, 1) f32 output block; accumulates sum_j exp(logit - 1/T)
              across key tiles and holds the row logsumexp after the last one.
    """
    qi = pl.program_id(0)
    ki = pl.program_id(1)
    tq = zq_ref.shape[0]
    tk = zk_ref.shape[0]

    @pl.when(ki == 0)
    def _init():
        lse_ref[...] = jnp.zeros_like(lse_ref)

    # logits[i, j] = <zq_i, zk_j>; 1/temperature is already folded into the
    # pre-normalized operands. Contract the last dims of BOTH operands so the
    # MXU is fed directly (no materialized transpose).
    logits = lax.dot_general(zq_ref[...], zk_ref[...],
                             (((1,), (1,)), ((), ())),
                             preferred_element_type=jnp.float32)

    # Fixed-max streaming sum-exp: rows are unit-norm, so logits <= 1/T and
    # exp(logits - 1/T) lies in (0, 1]; no running max / rescale needed.
    e = jnp.exp(logits - inv_temp)

    # The self-similarity diagonal is excluded from the softmax denominator.
    # Only grid steps whose global row range intersects the column range can
    # contain diagonal entries; gate the per-logit masking on that scalar test
    # so the (majority of) off-diagonal steps skip it entirely.
    row0 = qi * tq
    col0 = ki * tk
    has_diag = jnp.logical_and(row0 < col0 + tk, col0 < row0 + tq)

    @pl.when(jnp.logical_not(has_diag))
    def _accum_plain():
        lse_ref[...] += jnp.sum(e, axis=1, keepdims=True)

    @pl.when(has_diag)
    def _accum_masked():
        rel = (lax.broadcasted_iota(jnp.int32, (tq, tk), 0)
               - lax.broadcasted_iota(jnp.int32, (tq, tk), 1))
        on_diag = rel == (col0 - row0)
        lse_ref[...] += jnp.sum(jnp.where(on_diag, 0.0, e),
                                axis=1, keepdims=True)

    @pl.when(ki == pl.num_programs(1) - 1)
    def _finalize():
        # logsumexp_j(logits) with the fixed max 1/T; the positive-pair logit
        # is subtracted in the wrapper.
        lse_ref[...] = inv_temp + jnp.log(lse_ref[...])


def _pick_row_tile(total, preferred=256):
    """Row (query) tile: divides 2N and keeps >= 2 row tiles when possible so
    the 'parallel' grid axis can shard across v7x's two TensorCores."""
    for c in (preferred, 512, 256, 128):
        if c <= total // 2 and total % c == 0:
            return c
    half = total // 2
    if half >= 8 and half % 8 == 0:
        return half
    for c in (64, 32, 16, 8):
        if c <= total // 2 and total % c == 0:
            return c
    return total  # whole-array block (always a legal BlockSpec)


def _vmem_footprint(tq, tk, d, itemsize):
    blocks = 2 * (tq + tk) * d * itemsize   # double-buffered input blocks
    temps = 6 * tq * tk * 4                 # logits / exp / mask temporaries
    out = 2 * tq * 4                        # (tq, 1) output block
    return blocks + temps + out


def _pick_key_tile(total, d, itemsize, tq, budget=16 * 2**20):
    """Key tile: single-key-tile fast path when it fits in VMEM, else stream
    in multiples of 256 (full MXU width on v6e/v7x)."""
    if _vmem_footprint(tq, total, d, itemsize) <= budget:
        return total
    for c in (1024, 512, 256, 128):
        if total % c == 0 and _vmem_footprint(tq, c, d, itemsize) <= budget:
            return c
    for c in (64, 32, 16, 8):
        if total % c == 0:
            return c
    return total


def nxtent_loss(z1, z2, labels_i=None, labels_j=None, *, temperature=0.1,
                block_q=None, block_k=None, matmul_dtype=None):
    """Pallas implementation of NXTentLoss.forward. Returns a scalar f32."""
    del labels_i, labels_j  # unused by the reference forward
    n, d = z1.shape
    assert z2.shape == (n, d), "z1 and z2 must share (N, D)"
    total = 2 * n
    inv_temp = 1.0 / float(temperature)

    # ---- O(2N*D) preprocessing stays in XLA (negligible vs. the O((2N)^2*D)
    # kernel work and removes all per-tile normalization from the kernel).
    z = jnp.concatenate([z1, z2], axis=0).astype(jnp.float32)       # (2N, D)
    # F.normalize(dim=1), eps-guarded, with sqrt(1/T) folded into the rows.
    norm = jnp.sqrt(jnp.maximum(jnp.sum(z * z, axis=1, keepdims=True), 1e-24))
    zs = (z / norm) * jnp.sqrt(jnp.float32(inv_temp))
    # Positive-pair logits: global row r pairs with (r + N) mod 2N; symmetric,
    # so compute once for the first half and duplicate.
    pos = jnp.sum(zs[:n] * zs[n:], axis=1)                          # (N,)
    pos = jnp.concatenate([pos, pos], axis=0)                       # (2N,)

    # bf16 matmul operands only pay off (and stay accurate enough) for large D.
    if matmul_dtype is None:
        matmul_dtype = jnp.bfloat16 if d >= 256 else jnp.float32
    zmm = zs.astype(matmul_dtype)
    itemsize = jnp.dtype(matmul_dtype).itemsize

    tq = block_q if block_q is not None else _pick_row_tile(total)
    tk = block_k if block_k is not None else _pick_key_tile(total, d, itemsize, tq)
    assert total % tq == 0 and total % tk == 0, "tiles must divide 2N"

    vmem_limit = int(min(60 * 2**20,
                         max(32 * 2**20,
                             2 * _vmem_footprint(tq, tk, d, itemsize))))

    cost = pl.CostEstimate(
        flops=2 * total * total * d,
        transcendentals=total * total + total,            # exp per logit + log per row
        bytes_accessed=(total * d * itemsize              # query rows
                        + (total // tq) * total * d * itemsize  # key re-streaming
                        + total * 4),                     # per-row output
    )

    kernel = functools.partial(_ntxent_lse_kernel, inv_temp=inv_temp)

    lse = pl.pallas_call(
        kernel,
        out_shape=jax.ShapeDtypeStruct((total, 1), jnp.float32),
        grid_spec=pltpu.PrefetchScalarGridSpec(
            num_scalar_prefetch=0,
            grid=(total // tq, total // tk),
            in_specs=[
                pl.BlockSpec((tq, d), lambda qi, ki: (qi, 0)),   # query rows
                pl.BlockSpec((tk, d), lambda qi, ki: (ki, 0)),   # key rows
            ],
            out_specs=pl.BlockSpec((tq, 1), lambda qi, ki: (qi, 0)),
        ),
        compiler_params=pltpu.CompilerParams(
            dimension_semantics=("parallel", "arbitrary"),
            vmem_limit_bytes=vmem_limit),
        cost_estimate=cost,
    )(zmm, zmm)

    # TODO(synk): the positive-pair subtraction and scalar mean stay in the
    # wrapper: the row-tile grid axis is "parallel", so a shared scalar
    # accumulator inside the kernel would not be safe across cores.
    return jnp.mean(lse[:, 0] - pos)


def _reference(z1, z2, temperature):
    z = jnp.concatenate([z1, z2], axis=0)
    z = z / jnp.linalg.norm(z, axis=1, keepdims=True)
    sim = (z @ z.T) / temperature
    n2 = z.shape[0]
    sim = jnp.where(jnp.eye(n2, dtype=bool), -1e9, sim)
    n = n2 // 2
    pos = jnp.concatenate([jnp.arange(n, 2 * n), jnp.arange(0, n)])
    sim_pos = sim[jnp.arange(n2), pos]
    return jnp.mean(jax.nn.logsumexp(sim, axis=1) - sim_pos)


if __name__ == "__main__":
    key = jax.random.PRNGKey(0)
    k1, k2 = jax.random.split(key, 2)

    N, D = 8, 32  # small batch of embeddings (2N = 16 rows total)
    z1 = jax.random.normal(k1, (N, D), dtype=jnp.float32)
    z2 = jax.random.normal(k2, (N, D), dtype=jnp.float32)
    labels_i = jnp.arange(N, dtype=jnp.int32)  # unused by forward
    labels_j = jnp.arange(N, dtype=jnp.int32)  # unused by forward

    ref = _reference(z1, z2, 0.1)

    # Auto tiling -> single-key-tile fast path, grid (2, 1).
    loss_fast = nxtent_loss(z1, z2, labels_i, labels_j, temperature=0.1)
    # Forced key tiling -> exercises the streamed multi-key-tile path, grid (2, 2).
    loss_tiled = nxtent_loss(z1, z2, labels_i, labels_j, temperature=0.1,
                             block_q=8, block_k=8)
    # Non-tile-friendly batch -> whole-array fallback blocks, grid (1, 1).
    loss_odd = nxtent_loss(z1[:6], z2[:6], temperature=0.1)
    jax.block_until_ready((loss_fast, loss_tiled, loss_odd))

    assert jnp.allclose(loss_fast, ref, rtol=1e-4, atol=1e-4), (loss_fast, ref)
    assert jnp.allclose(loss_tiled, ref, rtol=1e-4, atol=1e-4), (loss_tiled, ref)
    ref_odd = _reference(z1[:6], z2[:6], 0.1)
    assert jnp.allclose(loss_odd, ref_odd, rtol=1e-4, atol=1e-4), (loss_odd, ref_odd)

    print("KERNEL_OK")
</pallas_src>

<mosaic_0001>
module attributes {stable_mosaic.version = 11 : i64} {
  func.func @_ntxent_lse_kernel(%arg0: i32, %arg1: i32, %arg2: memref<8x32xf32, #tpu.memory_space<vmem>>, %arg3: memref<16x32xf32, #tpu.memory_space<vmem>>, %arg4: memref<8x1xf32, #tpu.memory_space<vmem>>) attributes {dimension_semantics = [#tpu.dimension_semantics<parallel>, #tpu.dimension_semantics<arbitrary>], iteration_bounds = array<i64: 2, 1>, scalar_prefetch = 0 : i64, scratch_operands = 0 : i64, tpu.core_type = #tpu.core_type<tc>, window_params = [{transform_indices = @transform_0, window_bounds = array<i64: 8, 32>}, {transform_indices = @transform_1, window_bounds = array<i64: 16, 32>}, {transform_indices = @transform_2, window_bounds = array<i64: 8, 1>}]} {
    %c0_i32 = arith.constant 0 : i32
    %0 = arith.cmpi eq, %arg1, %c0_i32 : i32
    %1 = arith.extui %0 : i1 to i32
    %c0_i32_0 = arith.constant 0 : i32
    %2 = arith.cmpi ne, %1, %c0_i32_0 : i32
    scf.if %2 {
      %cst_11 = arith.constant 0.000000e+00 : f32
      %24 = vector.broadcast %cst_11 : f32 to vector<8x1xf32>
      %c0_12 = arith.constant 0 : index
      %c0_13 = arith.constant 0 : index
      %25 = vector.load %arg4[%c0_12, %c0_13] : memref<8x1xf32, #tpu.memory_space<vmem>>, vector<8x1xf32>
      tpu.vector_store %arg4[%c0_12, %c0_13], %24 {strides = array<i32>} : memref<8x1xf32, #tpu.memory_space<vmem>>, vector<8x1xf32>,
    } else {
    }
    %c0 = arith.constant 0 : index
    %c0_1 = arith.constant 0 : index
    %3 = vector.load %arg2[%c0, %c0_1] : memref<8x32xf32, #tpu.memory_space<vmem>>, vector<8x32xf32>
    %c0_2 = arith.constant 0 : index
    %c0_3 = arith.constant 0 : index
    %4 = vector.load %arg3[%c0_2, %c0_3] : memref<16x32xf32, #tpu.memory_space<vmem>>, vector<16x32xf32>
    %cst = arith.constant dense<0.000000e+00> : vector<8x16xf32>
    %5 = tpu.matmul %3, %4, %cst {dimension_numbers = #tpu.dot_dimension_numbers<[1], [1], [0], [0], [0, 0, 1, 0], [], []>} : vector<8x32xf32>, vector<16x32xf32>, vector<8x16xf32> -> vector<8x16xf32>
    %cst_4 = arith.constant 1.000000e+01 : f32
    %6 = vector.broadcast %cst_4 : f32 to vector<8x16xf32>
    %7 = arith.subf %5, %6 : vector<8x16xf32>
    %8 = math.exp %7 : vector<8x16xf32>
    %c8_i32 = arith.constant 8 : i32
    %9 = arith.muli %arg0, %c8_i32 : i32
    %c16_i32 = arith.constant 16 : i32
    %10 = arith.muli %arg1, %c16_i32 : i32
    %c16_i32_5 = arith.constant 16 : i32
    %11 = arith.addi %10, %c16_i32_5 : i32
    %12 = arith.cmpi slt, %9, %11 : i32
    %c8_i32_6 = arith.constant 8 : i32
    %13 = arith.addi %9, %c8_i32_6 : i32
    %14 = arith.cmpi slt, %10, %13 : i32
    %15 = arith.andi %12, %14 : i1
    %true = arith.constant true
    %16 = arith.xori %15, %true : i1
    %17 = arith.extui %16 : i1 to i32
    %c0_i32_7 = arith.constant 0 : i32
    %18 = arith.cmpi ne, %17, %c0_i32_7 : i32
    scf.if %18 {
      %c0_11 = arith.constant 0 : index
      %c0_12 = arith.constant 0 : index
      %24 = vector.load %arg4[%c0_11, %c0_12] : memref<8x1xf32, #tpu.memory_space<vmem>>, vector<8x1xf32>
      %cst_13 = arith.constant dense<0.000000e+00> : vector<8xf32>
      %25 = vector.multi_reduction <add>, %8, %cst_13 [1] : vector<8x16xf32> to vector<8xf32>
      %26 = vector.shape_cast %25 : vector<8xf32> to vector<8x1xf32>
      %27 = arith.addf %24, %26 : vector<8x1xf32>
      %c0_14 = arith.constant 0 : index
      %c0_15 = arith.constant 0 : index
      %28 = vector.load %arg4[%c0_14, %c0_15] : memref<8x1xf32, #tpu.memory_space<vmem>>, vector<8x1xf32>
      tpu.vector_store %arg4[%c0_14, %c0_15], %27 {strides = array<i32>} : memref<8x1xf32, #tpu.memory_space<vmem>>, vector<8x1xf32>,
    } else {
    }
    %19 = arith.extui %15 : i1 to i32
    %c0_i32_8 = arith.constant 0 : i32
    %20 = arith.cmpi ne, %19, %c0_i32_8 : i32
    scf.if %20 {
      %24 = tpu.iota {dimensions = array<i32: 0>} : vector<8x16xi32>
      %25 = tpu.iota {dimensions = array<i32: 1>} : vector<8x16xi32>
      %26 = arith.subi %24, %25 : vector<8x16xi32>
      %27 = arith.subi %10, %9 : i32
      %28 = vector.broadcast %27 : i32 to vector<8x16xi32>
      %29 = arith.cmpi eq, %26, %28 : vector<8x16xi32>
      %c0_11 = arith.constant 0 : index
      %c0_12 = arith.constant 0 : index
      %30 = vector.load %arg4[%c0_11, %c0_12] : memref<8x1xf32, #tpu.memory_space<vmem>>, vector<8x1xf32>
      %cst_13 = arith.constant 0.000000e+00 : f32
      %31 = vector.broadcast %cst_13 : f32 to vector<8x16xf32>
      %32 = arith.select %29, %31, %8 : vector<8x16xi1>, vector<8x16xf32>
      %cst_14 = arith.constant dense<0.000000e+00> : vector<8xf32>
      %33 = vector.multi_reduction <add>, %32, %cst_14 [1] : vector<8x16xf32> to vector<8xf32>
      %34 = vector.shape_cast %33 : vector<8xf32> to vector<8x1xf32>
      %35 = arith.addf %30, %34 : vector<8x1xf32>
      %c0_15 = arith.constant 0 : index
      %c0_16 = arith.constant 0 : index
      %36 = vector.load %arg4[%c0_15, %c0_16] : memref<8x1xf32, #tpu.memory_space<vmem>>, vector<8x1xf32>
      tpu.vector_store %arg4[%c0_15, %c0_16], %35 {strides = array<i32>} : memref<8x1xf32, #tpu.memory_space<vmem>>, vector<8x1xf32>,
    } else {
    }
    %c0_i32_9 = arith.constant 0 : i32
    %21 = arith.cmpi eq, %arg1, %c0_i32_9 : i32
    %22 = arith.extui %21 : i1 to i32
    %c0_i32_10 = arith.constant 0 : i32
    %23 = arith.cmpi ne, %22, %c0_i32_10 : i32
    scf.if %23 {
      %c0_11 = arith.constant 0 : index
      %c0_12 = arith.constant 0 : index
      %24 = vector.load %arg4[%c0_11, %c0_12] : memref<8x1xf32, #tpu.memory_space<vmem>>, vector<8x1xf32>
      %25 = math.log %24 : vector<8x1xf32>
      %cst_13 = arith.constant 1.000000e+01 : f32
      %26 = vector.broadcast %cst_13 : f32 to vector<8x1xf32>
      %27 = arith.addf %26, %25 : vector<8x1xf32>
      %c0_14 = arith.constant 0 : index
      %c0_15 = arith.constant 0 : index
      %28 = vector.load %arg4[%c0_14, %c0_15] : memref<8x1xf32, #tpu.memory_space<vmem>>, vector<8x1xf32>
      tpu.vector_store %arg4[%c0_14, %c0_15], %27 {strides = array<i32>} : memref<8x1xf32, #tpu.memory_space<vmem>>, vector<8x1xf32>,
    } else {
    }
    return
  }
  func.func @transform_0(%arg0: i32, %arg1: i32) -> (i32, i32) {
    %c0_i32 = arith.constant 0 : i32
    %c0_i32_0 = arith.constant 0 : i32
    return %arg0, %c0_i32 : i32, i32
  }
  func.func @transform_1(%arg0: i32, %arg1: i32) -> (i32, i32) {
    %c0_i32 = arith.constant 0 : i32
    %c0_i32_0 = arith.constant 0 : i32
    return %arg1, %c0_i32 : i32, i32
  }
  func.func @transform_2(%arg0: i32, %arg1: i32) -> (i32, i32) {
    %c0_i32 = arith.constant 0 : i32
    %c0_i32_0 = arith.constant 0 : i32
    return %arg0, %c0_i32 : i32, i32
  }
}

</mosaic_0001>

<llo_original>
// kernel: tpu_custom_call.1
$region0: #{tpu_custom_call.1}
  #allocation0 [shape = 'u32[]', space=smem, size = 0x4, offset = 0x4, fixed_abs, tag = 'smem constant byte address 0x4 - core index']
  #allocation1 [shape = 'u32[144,128]{1,0:T(1,128)}', space=vmem, size = 0x12000, scoped, tag = 'internal scratch']
  %s0 = inlined_call_operand.hbm [shape: f32[16,32], index: 0, kind: input, shape index: {}]
  %s1 = inlined_call_operand.hbm [shape: f32[16,32], index: 1, kind: input, shape index: {}]
  %s2 = inlined_call_operand.vmem [shape: f32[16,1], index: 2, kind: output, shape index: {}]
  %s3 = sld [smem:[#allocation0]]
  $region65: #{tpu_custom_call.1} parent=0
    _
  %s5 = ssub.s32 1, %s3
  %s6 = scalar_select 0, %s5, %s3
  $region1: #{tpu_custom_call.1} parent=0
    #allocation2 [shape = 'u8[8192]{0}', space=vmem, size = 0x2000, scoped, tag = 'input window, operand 0']
    #allocation3 [shape = 's32[2]{0}', space=sflag, size = 0x8, scoped, tag = 'scoped memory for tpu_custom_call.1']
    #allocation4 [shape = 'u8[8192]{0}', space=vmem, size = 0x2000, scoped, tag = 'input window, operand 1, single buffered']
    #allocation5 [shape = 's32[1]{0}', space=sflag, size = 0x4, scoped, tag = 'scoped memory for tpu_custom_call.1']
    %7 = vsyncpa [#allocation3], 0
    %s8 = scalar_lea.sflag [#allocation3], 1
    %9 = vsyncpa %s8, 0
    %10 = vsyncpa [#allocation5], 0
    loop: start=0, step=1, limit=4
    $region2: #{tpu_custom_call.1} parent=1 // loop_pre_header
      _
    $region3: #{tpu_custom_call.1} parent=1 // loop_header
      %s12 = sphi 0, %s16
      %p13 = scmp.ge.s32.totalorder %s12, 4
      %s19 = sphi 0, %s31
      %s20 = sphi 0, %s27
      %s21 = sphi 0, %s19
      %s22 = sphi 0, %s20
      %s23 = sphi 0, %s21
      %s24 = sphi 0, %s22
      %s34 = sphi 0, %s36
      %s37 = sphi 0, %s34
      %s38 = sphi 0, %s37
      %s54 = sphi 0, %s38
      %s60 = sphi 0, %s62
      %s63 = sphi 0, %s60
      %s64 = sphi 0, %s63
      %s80 = sphi 0, %s64
      %s86 = sphi 0, %s88
      %s89 = sphi 0, %s86
      %s90 = sphi 0, %s89
      %s106 = sphi 0, %s90
    $region4: #{tpu_custom_call.1} parent=1 // loop_header_branch
      %15 = sbr.rel (%p13) target = $region8
    $region5: #{tpu_custom_call.1} parent=1 // loop_body
      %s17 = ssub.s32 %s12, 1
      %s18 = ssub.s32 %s12, 2
      %s25 = sadd.s32 1, %s20
      %p26 = scmp.ge.s32.totalorder %s25, 1
      %s27 = scalar_select %p26, 0, %s25
      %s28 = sadd.s32 1, %s19
      %s29 = scalar_select %p26, %s28, %s19
      %p30 = scmp.ge.s32.totalorder %s29, 2
      %s31 = scalar_select %p30, 0, %s29
      %s32 = ssub.s32 %s19, %s31
      %p33 = scmp.eq.s32.totalorder %s32, 0
      %s35 = sadd.s32 %s34, 1
      %s36 = scalar_select %p33, %s34, %s35
      %p39 = pneg %p33
      %p40 = scmp.eq.s32.totalorder %s12, 1
      %p41 = por %p39, %p40
      %p42 = scmp.ne.s32.totalorder %s34, %s37
      %p43 = scmp.eq.s32.totalorder %s12, 0
      %p44 = por %p42, %p43
      %p45 = scmp.ne.s32.totalorder %s34, %s37
      %p46 = scmp.eq.s32.totalorder %s17, 1
      %p47 = por %p45, %p46
      %p48 = scmp.ne.s32.totalorder %s37, %s38
      %p49 = scmp.eq.s32.totalorder %s17, 0
      %p50 = por %p48, %p49
      %p51 = scmp.ne.s32.totalorder %s37, %s38
      %p52 = scmp.eq.s32.totalorder %s18, 1
      %p53 = por %p51, %p52
      %p55 = scmp.ne.s32.totalorder %s38, %s54
      %p56 = scmp.eq.s32.totalorder %s18, 0
      %p57 = por %p55, %p56
      %s58 = ssub.s32 %s20, %s27
      %p59 = scmp.eq.s32.totalorder %s58, 0
      %s61 = sadd.s32 %s60, 1
      %s62 = scalar_select %p59, %s60, %s61
      %p65 = pneg %p59
      %p66 = scmp.eq.s32.totalorder %s12, 1
      %p67 = por %p65, %p66
      %p68 = scmp.ne.s32.totalorder %s60, %s63
      %p69 = scmp.eq.s32.totalorder %s12, 0
      %p70 = por %p68, %p69
      %p71 = scmp.ne.s32.totalorder %s60, %s63
      %p72 = scmp.eq.s32.totalorder %s17, 1
      %p73 = por %p71, %p72
      %p74 = scmp.ne.s32.totalorder %s63, %s64
      %p75 = scmp.eq.s32.totalorder %s17, 0
      %p76 = por %p74, %p75
      %p77 = scmp.ne.s32.totalorder %s63, %s64
      %p78 = scmp.eq.s32.totalorder %s18, 1
      %p79 = por %p77, %p78
      %p81 = scmp.ne.s32.totalorder %s64, %s80
      %p82 = scmp.eq.s32.totalorder %s18, 0
      %p83 = por %p81, %p82
      %s84 = ssub.s32 %s19, %s31
      %p85 = scmp.eq.s32.totalorder %s84, 0
      %s87 = sadd.s32 %s86, 1
      %s88 = scalar_select %p85, %s86, %s87
      %p91 = pneg %p85
      %p92 = scmp.eq.s32.totalorder %s12, 1
      %p93 = por %p91, %p92
      %p94 = scmp.ne.s32.totalorder %s86, %s89
      %p95 = scmp.eq.s32.totalorder %s12, 0
      %p96 = por %p94, %p95
      %p97 = scmp.ne.s32.totalorder %s86, %s89
      %p98 = scmp.eq.s32.totalorder %s17, 1
      %p99 = por %p97, %p98
      %p100 = scmp.ne.s32.totalorder %s89, %s90
      %p101 = scmp.eq.s32.totalorder %s17, 0
      %p102 = por %p100, %p101
      %p103 = scmp.ne.s32.totalorder %s89, %s90
      %p104 = scmp.eq.s32.totalorder %s18, 1
      %p105 = por %p103, %p104
      %p107 = scmp.ne.s32.totalorder %s90, %s106
      %p108 = scmp.eq.s32.totalorder %s18, 0
      %p109 = por %p107, %p108
      %p110 = scmp.le.s32.totalorder 1, %s12
      %p111 = scmp.lt.s32.totalorder %s12, 3
      %p112 = pnand %p110, %p111
      %p113 = pneg %p112
      // Predicated region
      $region9: #{tpu_custom_call.1} parent=5 // pred_check
        _
      $region10: #{tpu_custom_call.1} parent=5 // pred_check_branch
        %115 = sbr.rel (%p112) target = $region12
      $region11: #{tpu_custom_call.1} parent=5 // pred_region
        %s116 = ssub.s32 %s12, 1
        // Predicated region
        $region13: #{tpu_custom_call.1} parent=11 // pred_check
          %p117 = pneg %p76
        $region14: #{tpu_custom_call.1} parent=11 // pred_check_branch
          %119 = sbr.rel (%p117) target = $region16
        $region15: #{tpu_custom_call.1} parent=11 // pred_region
          %s120 = smul.u32 2, %s22
          %s122 = ssub.s32 256, 256
          %123 = vsyncadd [#allocation5], %s122
          %s124 = smul.addr %s120, 128
          %s125 = scalar_lea.hbm %s1, %s124
          %s126 = sshll.u32 [#allocation4], 4
          %s127 = int_to_ptr.vmem [resolvable:$true] %s126
          %132 = dma.hbm_to_vmem [thread:$0]  %s125, 256, %s127, [#allocation5], 128, 128, 8
        $region16: #{tpu_custom_call.1} parent=11 // pred_fallthru
          _
      $region12: #{tpu_custom_call.1} parent=5 // pred_fallthru
        _
      %p133 = scmp.lt.s32.totalorder %s12, 2
      // Predicated region
      $region17: #{tpu_custom_call.1} parent=5 // pred_check
        %p134 = pneg %p133
      $region18: #{tpu_custom_call.1} parent=5 // pred_check_branch
        %136 = sbr.rel (%p134) target = $region20
      $region19: #{tpu_custom_call.1} parent=5 // pred_region
        // Predicated region
        $region21: #{tpu_custom_call.1} parent=19 // pred_check
          %p137 = pneg %p44
        $region22: #{tpu_custom_call.1} parent=19 // pred_check_branch
          %139 = sbr.rel (%p137) target = $region24
        $region23: #{tpu_custom_call.1} parent=19 // pred_region
          %s140 = sand.u32 %s34, 1
          %s141 = scalar_lea.sflag [#allocation3], %s140
          %s142 = sand.u32 %s34, 1
          %s143 = smul.addr %s142, 8
          %s144 = scalar_lea.vmem [#allocation2], %s143
          %s146 = ssub.s32 128, 128
          %147 = vsyncadd %s141, %s146
          %s148 = smul.addr %s19, 128
          %s149 = scalar_lea.hbm %s0, %s148
          %s151 = sshll.u32 %s144, 4
          %s152 = int_to_ptr.vmem [resolvable:$true] %s151
          %154 = dma.hbm_to_vmem [thread:$0]  %s149, 128, %s152, %s141
        $region24: #{tpu_custom_call.1} parent=19 // pred_fallthru
          _
      $region20: #{tpu_custom_call.1} parent=5 // pred_fallthru
        _
      %p155 = scmp.le.s32.totalorder 1, %s12
      %p156 = scmp.lt.s32.totalorder %s12, 3
      %p157 = pnand %p155, %p156
      %p158 = pneg %p157
      // Predicated region
      $region25: #{tpu_custom_call.1} parent=5 // pred_check
        _
      $region26: #{tpu_custom_call.1} parent=5 // pred_check_branch
        %160 = sbr.rel (%p157) target = $region28
      $region27: #{tpu_custom_call.1} parent=5 // pred_region
        %s161 = ssub.s32 %s12, 1
        %s162 = sand.u32 %s37, 1
        %s163 = scalar_lea.sflag [#allocation3], %s162
        %s164 = sand.u32 %s37, 1
        %s165 = smul.addr %s164, 8
        %s166 = scalar_lea.vmem [#allocation2], %s165
        // Predicated region
        $region29: #{tpu_custom_call.1} parent=27 // pred_check
          %p167 = pneg %p50
        $region30: #{tpu_custom_call.1} parent=27 // pred_check_branch
          %169 = sbr.rel (%p167) target = $region32
        $region31: #{tpu_custom_call.1} parent=27 // pred_region
          %170 = dma.done %s163, 128
        $region32: #{tpu_custom_call.1} parent=27 // pred_fallthru
          _
        // Predicated region
        $region33: #{tpu_custom_call.1} parent=27 // pred_check
          %p171 = pneg %p76
        $region34: #{tpu_custom_call.1} parent=27 // pred_check_branch
          %173 = sbr.rel (%p171) target = $region36
        $region35: #{tpu_custom_call.1} parent=27 // pred_region
          %174 = dma.done [#allocation5], 256
        $region36: #{tpu_custom_call.1} parent=27 // pred_fallthru
          _
        %s175 = sand.u32 %s37, 1
        %s176 = scalar_lea.sflag [#allocation3], %s175
        %s177 = sand.u32 %s37, 1
        %s178 = smul.addr %s177, 8
        %s179 = scalar_lea.vmem [#allocation2], %s178
        %p180 = pneg %p50
        %p181 = pneg %p47
        %p182 = pneg %p76
        %p183 = pneg %p73
        %p184 = pneg %p102
        %p185 = pneg %p99
        %p186 = scmp.lt.s32.totalorder %s21, 1
        %s187 = scalar_select %p186, %s21, 1
        %s188 = smul.addr %s187, 8
        %s189 = scalar_lea.vmem %s2, %s188
        %s190 = smul.u32 2, %s22
        %p191 = scmp.lt.s32.totalorder %s21, 1
        %s192 = scalar_select %p191, %s21, 1
        %s193 = smul.addr %s192, 8
        %s194 = scalar_lea.vmem %s2, %s193
        %p195 = scmp.eq.s32.totalorder %s22, 0
        // Predicated region
        $region37: #{tpu_custom_call.1} parent=27 // pred_check
          %p196 = pneg %p195
        $region38: #{tpu_custom_call.1} parent=27 // pred_check_branch
          %198 = sbr.rel (%p196) target = $region40
        $region39: #{tpu_custom_call.1} parent=27 // pred_region
          %vm199 = vcmask 7168
          %200 = vst.msk [vmem:[%s194] sm:$0xff] %vm199, 0.0
        $region40: #{tpu_custom_call.1} parent=27 // pred_fallthru
          _
        %v201 = vld [vmem:[%s166] sm:$0xff]
        %v202 = vld [vmem:[#allocation4] sm:$0xff]
        %v203 = vld [vmem:[#allocation4 + $0x8] sm:$0xff]
        %vm204 = vcmask 261120
        %v206 = vsel %vm204, %v201, 0
        %v209 = vsel %vm204, %v202, 0
        %v212 = vsel %vm204, %v203, 0
        %214 = vmatprep.subr.mxu0 0.0
        %215 = vmatpush1.xpose.msra.mxu0 %v209
        %216 = vmatprep.subr.mxu0 0.0
        %217 = vmatpush1.xpose.msra.mxu0 %v212
        %218 = vmatprep.subr.mxu0 0.0
        %219 = vmatpush1.xpose.msra.mxu0 0.0
        %220 = vmatprep.subr.mxu0 0.0
        %221 = vmatpush1.xpose.msra.mxu0 0.0
        %222 = vmatprep.subr.mxu0 0.0
        %223 = vmatpush1.xpose.msra.mxu0 0.0
        %224 = vmatprep.subr.mxu0 0.0
        %225 = vmatpush1.xpose.msra.mxu0 0.0
        %226 = vmatprep.subr.mxu0 0.0
        %227 = vmatpush1.xpose.msra.mxu0 0.0
        %228 = vmatprep.subr.mxu0 0.0
        %229 = vmatpush1.xpose.msra.mxu0 0.0
        %230 = vmatprep.subr.mxu0 0.0
        %231 = vmatpush1.xpose.msra.mxu0 0.0
        %232 = vmatprep.subr.mxu0 0.0
        %233 = vmatpush1.xpose.msra.mxu0 0.0
        %234 = vmatprep.subr.mxu0 0.0
        %235 = vmatpush1.xpose.msra.mxu0 0.0
        %236 = vmatprep.subr.mxu0 0.0
        %237 = vmatpush1.xpose.msra.mxu0 0.0
        %238 = vmatprep.subr.mxu0 0.0
        %239 = vmatpush1.xpose.msra.mxu0 0.0
        %240 = vmatprep.subr.mxu0 0.0
        %241 = vmatpush1.xpose.msra.mxu0 0.0
        %242 = vmatprep.subr.mxu0 0.0
        %243 = vmatpush1.xpose.msra.mxu0 0.0
        %244 = vmatprep.subr.mxu0 0.0
        %245 = vmatpush1.xpose.msra.mxu0 0.0
        %246 = vmatprep.subr.mxu0 0.0
        %247 = vmatpush1.xpose.msra.mxu0 0.0
        %248 = vmatprep.subr.mxu0 0.0
        %249 = vmatpush1.xpose.msra.mxu0 0.0
        %250 = vmatprep.subr.mxu0 0.0
        %251 = vmatpush1.xpose.msra.mxu0 0.0
        %252 = vmatprep.subr.mxu0 0.0
        %253 = vmatpush1.xpose.msra.mxu0 0.0
        %254 = vmatprep.subr.mxu0 0.0
        %255 = vmatpush1.xpose.msra.mxu0 0.0
        %256 = vmatprep.subr.mxu0 0.0
        %257 = vmatpush1.xpose.msra.mxu0 0.0
        %258 = vmatprep.subr.mxu0 0.0
        %259 = vmatpush1.xpose.msra.mxu0 0.0
        %260 = vmatprep.subr.mxu0 0.0
        %261 = vmatpush1.xpose.msra.mxu0 0.0
        %262 = vmatprep.subr.mxu0 0.0
        %263 = vmatpush1.xpose.msra.mxu0 0.0
        %264 = vmatprep.subr.mxu0 0.0
        %265 = vmatpush1.xpose.msra.mxu0 0.0
        %266 = vmatprep.subr.mxu0 0.0
        %267 = vmatpush1.xpose.msra.mxu0 0.0
        %268 = vmatprep.subr.mxu0 0.0
        %269 = vmatpush1.xpose.msra.mxu0 0.0
        %270 = vmatprep.subr.mxu0 0.0
        %271 = vmatpush1.xpose.msra.mxu0 0.0
        %272 = vmatprep.subr.mxu0 0.0
        %273 = vmatpush1.xpose.msra.mxu0 0.0
        %274 = vmatprep.subr.mxu0 0.0
        %275 = vmatpush1.xpose.msra.mxu0 0.0
        %276 = vmatprep.subr.mxu0 0.0
        %277 = vmatpush1.xpose.msra.mxu0 0.0
        %278 = vmatprep.mubr.f32.mxu0 0.0
        %279 = vmatmul.mubr.f32.gmra.mrb[0].mxu0 %v206
        %v280 = vpop.f32.mrb[0].mxu0
        %v281 = vadd.f32 0.0, %v280
        %v282 = vpop.f32.mrb[0].mxu0
        %283 = vdwg.mxu0
        %v284 = vsub.f32 %v281, 10.0
        %v285 = vmul.f32 %v284, 1.442695
        %v286 = vpow.pop %v285
        %s287 = smul.u32 %s21, 8
        %s288 = smul.u32 %s22, 16
        %s289 = sadd.s32 %s288, 16
        %p290 = scmp.lt.s32.totalorder %s287, %s289
        %s291 = sadd.s32 %s287, 8
        %p292 = scmp.lt.s32.totalorder %s288, %s291
        %p293 = pnand %p290, %p292
        %p294 = pneg %p293
        // Predicated region
        $region41: #{tpu_custom_call.1} parent=27 // pred_check
          _
        $region42: #{tpu_custom_call.1} parent=27 // pred_check_branch
          %296 = sbr.rel (%p293) target = $region44
        $region43: #{tpu_custom_call.1} parent=27 // pred_region
          %v297 = vlaneseq
          %v298 = vshrl.u32 %v297, 7
          %v299 = vlaneseq
          %v300 = vand.u32 %v299, 127
          %v301 = vsub.s32 %v298, %v300
          %s302 = ssub.s32 %s288, %s287
          %v303 = vstv %s302
          %vm304 = vcmp.eq.s32.totalorder %v301, %v303
          %v305 = vld [vmem:[%s194] sm:$0xff]
          %v306 = vsel %vm304, 0.0, %v286
          %vm307 = vcmask 130048
          %v308 = vsel %vm307, %v306, 0.0
          %309 = vadd.xlane.f32.xlu0 %v308
          %v310 = vpop.xlane.xlu0 %309
          %v311 = vadd.f32 %v305, %v310
          %vm312 = vcmask 7168
          %313 = vst.msk [vmem:[%s194] sm:$0xff] %vm312, %v311
        $region44: #{tpu_custom_call.1} parent=27 // pred_fallthru
          _
        // Predicated region
        $region45: #{tpu_custom_call.1} parent=27 // pred_check
          %p314 = pneg %p293
        $region46: #{tpu_custom_call.1} parent=27 // pred_check_branch
          %316 = sbr.rel (%p314) target = $region48
        $region47: #{tpu_custom_call.1} parent=27 // pred_region
          %v317 = vld [vmem:[%s194] sm:$0xff]
          %vm318 = vcmask 130048
          %v319 = vsel %vm318, %v286, 0.0
          %320 = vadd.xlane.f32.xlu0 %v319
          %v321 = vpop.xlane.xlu0 %320
          %v322 = vadd.f32 %v317, %v321
          %vm323 = vcmask 7168
          %324 = vst.msk [vmem:[%s194] sm:$0xff] %vm323, %v322
        $region48: #{tpu_custom_call.1} parent=27 // pred_fallthru
          _
        // Predicated region
        $region49: #{tpu_custom_call.1} parent=27 // pred_check
          %p325 = pneg %p195
        $region50: #{tpu_custom_call.1} parent=27 // pred_check_branch
          %327 = sbr.rel (%p325) target = $region52
        $region51: #{tpu_custom_call.1} parent=27 // pred_region
          %v328 = vld [vmem:[%s194] sm:$0xff]
          %v329 = vlog2.pop %v328
          %v330 = vmul.f32 %v329, 0.6931472
          %v331 = vadd.f32 %v330, 10.0
          %vm332 = vcmask 7168
          %333 = vst.msk [vmem:[%s194] sm:$0xff] %vm332, %v331
        $region52: #{tpu_custom_call.1} parent=27 // pred_fallthru
          _
        %p334 = scmp.lt.s32.totalorder %s21, 1
        %s335 = scalar_select %p334, %s21, 1
        %s336 = smul.addr %s335, 8
        %s337 = scalar_lea.vmem %s2, %s336
        // Predicated region
        $region53: #{tpu_custom_call.1} parent=27 // pred_check
          %p338 = pneg %p99
        $region54: #{tpu_custom_call.1} parent=27 // pred_check_branch
          %340 = sbr.rel (%p338) target = $region56
        $region55: #{tpu_custom_call.1} parent=27 // pred_region
          _
        $region56: #{tpu_custom_call.1} parent=27 // pred_fallthru
          _
      $region28: #{tpu_custom_call.1} parent=5 // pred_fallthru
        _
      %p341 = scmp.le.s32.totalorder 2, %s12
      // Predicated region
      $region57: #{tpu_custom_call.1} parent=5 // pred_check
        %p342 = pneg %p341
      $region58: #{tpu_custom_call.1} parent=5 // pred_check_branch
        %344 = sbr.rel (%p342) target = $region60
      $region59: #{tpu_custom_call.1} parent=5 // pred_region
        %s345 = ssub.s32 %s12, 2
        // Predicated region
        $region61: #{tpu_custom_call.1} parent=59 // pred_check
          %p346 = pneg %p105
        $region62: #{tpu_custom_call.1} parent=59 // pred_check_branch
          %348 = sbr.rel (%p346) target = $region64
        $region63: #{tpu_custom_call.1} parent=59 // pred_region
          %p349 = scmp.lt.s32.totalorder %s23, 1
          %s350 = scalar_select %p349, %s23, 1
          %s351 = smul.addr %s350, 8
          %s352 = scalar_lea.vmem %s2, %s351
        $region64: #{tpu_custom_call.1} parent=59 // pred_fallthru
          _
      $region60: #{tpu_custom_call.1} parent=5 // pred_fallthru
        _
    $region6: #{tpu_custom_call.1} parent=1 // loop_footer
      %s16 = sadd.s32 1, %s12
    $region7: #{tpu_custom_call.1} parent=1 // loop_footer_branch
      %11 = sbr.rel target = $region3
    $region8: #{tpu_custom_call.1} parent=1 // loop_exit
      _
    %353 = vsyncpa [#allocation3], 1
    %s354 = scalar_lea.sflag [#allocation3], 1
    %355 = vsyncpa %s354, 1
    %356 = vsyncpa [#allocation5], 1

</llo_original>
